<compile_context>
chip_gen: v6e
topology: v6e:2x2x1
jax: 0.10.0
libtpu: 0.0.40
codegen_flags: <defaults>
</compile_context>

<pallas_src>
import jax
import jax.numpy as jnp
from jax.experimental import pallas as pl
from jax.experimental.pallas import tpu as pltpu

NEG_SLOPE = 0.01  # PyTorch LeakyReLU default


def _filter_kernel(x_ref, w1_ref, b1_ref, w2_ref, b2_ref, o_ref):
    # x_ref:  (TM, C)   bf16 row tile
    # w1_ref: (C, H)    bf16
    # b1_ref: (1, H)    f32
    # w2_ref: (1, H)    f32   (second conv weight, lane-major row)
    # b2_ref: (1,)      f32   (SMEM scalar)
    # o_ref:  (TM, 1)   f32
    # MXU: bf16 operands, f32 accumulation.
    h = jnp.dot(x_ref[...], w1_ref[...], preferred_element_type=jnp.float32)
    h = h + b1_ref[...]
    h = jnp.where(h >= 0, h, NEG_SLOPE * h)                 # LeakyReLU (f32, VPU)
    # 512 -> 1 projection as VPU multiply + XLU lane reduce (avoids N=1 matmul).
    y = jnp.sum(h * w2_ref[...], axis=-1, keepdims=True) + b2_ref[0]
    o_ref[...] = jax.nn.sigmoid(y).astype(o_ref.dtype)


def _round_up(a, m):
    return ((a + m - 1) // m) * m


def filter_module_forward(x, w1, b1, w2, b2, *, row_tile=512):
    """x: (B, T, C) f32; w1: (C, H); b1: (H,); w2: (H, 1); b2: (1,) -> (B, T, 1) f32."""
    B, T, C = x.shape
    H = w1.shape[1]
    R = B * T

    # Row tile: multiple of 8 sublanes; cap at `row_tile` rows per grid step.
    TM = row_tile if R >= row_tile else _round_up(max(R, 1), 8)
    R_pad = _round_up(R, TM)
    n_tiles = R_pad // TM

    # Flatten (B, T) -> rows; cast matmul operands to bf16 once (f32 accumulation
    # happens inside the kernel via preferred_element_type).
    x2 = x.reshape(R, C).astype(jnp.bfloat16)
    if R_pad != R:
        x2 = jnp.pad(x2, ((0, R_pad - R), (0, 0)))
    w1_bf16 = w1.astype(jnp.bfloat16)
    b1_row = b1.reshape(1, H).astype(jnp.float32)
    w2_row = w2.reshape(1, H).astype(jnp.float32)
    b2_s = b2.reshape(1).astype(jnp.float32)

    out = pl.pallas_call(
        _filter_kernel,
        out_shape=jax.ShapeDtypeStruct((R_pad, 1), jnp.float32),
        grid_spec=pltpu.PrefetchScalarGridSpec(
            num_scalar_prefetch=0,
            grid=(n_tiles,),
            in_specs=[
                pl.BlockSpec((TM, C), lambda i: (i, 0)),      # x row tile
                pl.BlockSpec((C, H), lambda i: (0, 0)),       # W1 (VMEM resident)
                pl.BlockSpec((1, H), lambda i: (0, 0)),       # b1
                pl.BlockSpec((1, H), lambda i: (0, 0)),       # W2 as a row
                pl.BlockSpec(memory_space=pltpu.MemorySpace.SMEM),  # b2 scalar
            ],
            out_specs=pl.BlockSpec((TM, 1), lambda i: (i, 0)),
        ),
        compiler_params=pltpu.CompilerParams(
            dimension_semantics=("parallel",)),
    )(x2, w1_bf16, b1_row, w2_row, b2_s)

    return out[:R].reshape(B, T, 1).astype(x.dtype)


def reference_forward(x, w1, b1, w2, b2):
    """Pure-JAX reference with the same mixed precision (bf16 MXU operands)."""
    B, T, C = x.shape
    xr = x.reshape(B * T, C).astype(jnp.bfloat16)
    h = jnp.dot(xr, w1.astype(jnp.bfloat16),
                preferred_element_type=jnp.float32) + b1.reshape(1, -1)
    h = jnp.where(h >= 0, h, NEG_SLOPE * h)
    y = h @ w2 + b2
    return jax.nn.sigmoid(y).reshape(B, T, 1)


if __name__ == "__main__":
    key = jax.random.PRNGKey(0)
    B, T, C = 2, 8, 32   # batch, seq, len_feature
    HIDDEN = 512         # fixed by the module definition

    k_x, k_w1, k_b1, k_w2, k_b2 = jax.random.split(key, 5)
    x = jax.random.normal(k_x, (B, T, C), dtype=jnp.float32)

    # Conv1d(k=1) weights squeezed to 2D, stored transposed so kernel does x @ W.
    w1 = jax.random.normal(k_w1, (C, HIDDEN), dtype=jnp.float32) * 0.05
    b1 = jax.random.normal(k_b1, (HIDDEN,), dtype=jnp.float32) * 0.05
    w2 = jax.random.normal(k_w2, (HIDDEN, 1), dtype=jnp.float32) * 0.05
    b2 = jax.random.normal(k_b2, (1,), dtype=jnp.float32) * 0.05

    out = filter_module_forward(x, w1, b1, w2, b2)
    jax.block_until_ready(out)

    ref = reference_forward(x, w1, b1, w2, b2)
    assert out.shape == (B, T, 1), out.shape
    assert jnp.allclose(out, ref, atol=2e-3, rtol=1e-3), \
        float(jnp.max(jnp.abs(out - ref)))

    print("KERNEL_OK")
</pallas_src>

<mosaic_0001>
module attributes {stable_mosaic.version = 11 : i64} {
  func.func @_filter_kernel(%arg0: i32, %arg1: memref<16x32xbf16, #tpu.memory_space<vmem>>, %arg2: memref<32x512xbf16, #tpu.memory_space<vmem>>, %arg3: memref<1x512xf32, #tpu.memory_space<vmem>>, %arg4: memref<1x512xf32, #tpu.memory_space<vmem>>, %arg5: memref<1xf32, #tpu.memory_space<smem>>, %arg6: memref<16x1xf32, #tpu.memory_space<vmem>>) attributes {dimension_semantics = [#tpu.dimension_semantics<parallel>], iteration_bounds = array<i64: 1>, scalar_prefetch = 0 : i64, scratch_operands = 0 : i64, tpu.core_type = #tpu.core_type<tc>, window_params = [{transform_indices = @transform_0, window_bounds = array<i64: 16, 32>}, {pipeline_mode = #tpu.pipeline_mode<synchronous>, transform_indices = @transform_1, window_bounds = array<i64: 32, 512>}, {pipeline_mode = #tpu.pipeline_mode<synchronous>, transform_indices = @transform_2, window_bounds = array<i64: 1, 512>}, {pipeline_mode = #tpu.pipeline_mode<synchronous>, transform_indices = @transform_3, window_bounds = array<i64: 1, 512>}, {transform_indices = @transform_4, window_bounds = array<i64: 1>}, {transform_indices = @transform_5, window_bounds = array<i64: 16, 1>}]} {
    %c0 = arith.constant 0 : index
    %c0_0 = arith.constant 0 : index
    %0 = vector.load %arg1[%c0, %c0_0] : memref<16x32xbf16, #tpu.memory_space<vmem>>, vector<16x32xbf16>
    %c0_1 = arith.constant 0 : index
    %c0_2 = arith.constant 0 : index
    %1 = vector.load %arg2[%c0_1, %c0_2] : memref<32x512xbf16, #tpu.memory_space<vmem>>, vector<32x512xbf16>
    %cst = arith.constant dense<0.000000e+00> : vector<16x512xf32>
    %2 = tpu.matmul %0, %1, %cst {dimension_numbers = #tpu.dot_dimension_numbers<[1], [0], [0], [1], [0, 0, 1, 1], [], []>} : vector<16x32xbf16>, vector<32x512xbf16>, vector<16x512xf32> -> vector<16x512xf32>
    %c0_3 = arith.constant 0 : index
    %c0_4 = arith.constant 0 : index
    %3 = vector.load %arg3[%c0_3, %c0_4] : memref<1x512xf32, #tpu.memory_space<vmem>>, vector<1x512xf32>
    %4 = vector.broadcast %3 : vector<1x512xf32> to vector<16x512xf32>
    %5 = arith.addf %2, %4 : vector<16x512xf32>
    %cst_5 = arith.constant 0.000000e+00 : f32
    %6 = vector.broadcast %cst_5 : f32 to vector<16x512xf32>
    %7 = arith.cmpf oge, %5, %6 : vector<16x512xf32>
    %cst_6 = arith.constant 0.00999999977 : f32
    %8 = vector.broadcast %cst_6 : f32 to vector<16x512xf32>
    %9 = arith.mulf %8, %5 : vector<16x512xf32>
    %10 = arith.select %7, %5, %9 : vector<16x512xi1>, vector<16x512xf32>
    %c0_7 = arith.constant 0 : index
    %c0_8 = arith.constant 0 : index
    %11 = vector.load %arg4[%c0_7, %c0_8] : memref<1x512xf32, #tpu.memory_space<vmem>>, vector<1x512xf32>
    %12 = vector.broadcast %11 : vector<1x512xf32> to vector<16x512xf32>
    %13 = arith.mulf %10, %12 : vector<16x512xf32>
    %cst_9 = arith.constant dense<0.000000e+00> : vector<16xf32>
    %14 = vector.multi_reduction <add>, %13, %cst_9 [1] : vector<16x512xf32> to vector<16xf32>
    %15 = vector.shape_cast %14 : vector<16xf32> to vector<16x1xf32>
    %c0_10 = arith.constant 0 : index
    %16 = memref.load %arg5[%c0_10] : memref<1xf32, #tpu.memory_space<smem>>
    %17 = vector.broadcast %16 : f32 to vector<16x1xf32>
    %18 = arith.addf %15, %17 : vector<16x1xf32>
    %19 = arith.negf %18 : vector<16x1xf32>
    %20 = math.exp %19 : vector<16x1xf32>
    %cst_11 = arith.constant 1.000000e+00 : f32
    %21 = vector.broadcast %cst_11 : f32 to vector<16x1xf32>
    %22 = arith.addf %21, %20 : vector<16x1xf32>
    %23 = arith.divf %21, %22 : vector<16x1xf32>
    %c0_12 = arith.constant 0 : index
    %c0_13 = arith.constant 0 : index
    %24 = vector.load %arg6[%c0_12, %c0_13] : memref<16x1xf32, #tpu.memory_space<vmem>>, vector<16x1xf32>
    tpu.vector_store %arg6[%c0_12, %c0_13], %23 {strides = array<i32>} : memref<16x1xf32, #tpu.memory_space<vmem>>, vector<16x1xf32>,
    return
  }
  func.func @transform_0(%arg0: i32) -> (i32, i32) {
    %c0_i32 = arith.constant 0 : i32
    %c0_i32_0 = arith.constant 0 : i32
    return %arg0, %c0_i32 : i32, i32
  }
  func.func @transform_1(%arg0: i32) -> (i32, i32) {
    %c0_i32 = arith.constant 0 : i32
    %c0_i32_0 = arith.constant 0 : i32
    %c0_i32_1 = arith.constant 0 : i32
    return %c0_i32, %c0_i32_0 : i32, i32
  }
  func.func @transform_2(%arg0: i32) -> (i32, i32) {
    %c0_i32 = arith.constant 0 : i32
    %c0_i32_0 = arith.constant 0 : i32
    %c0_i32_1 = arith.constant 0 : i32
    return %c0_i32, %c0_i32_0 : i32, i32
  }
  func.func @transform_3(%arg0: i32) -> (i32, i32) {
    %c0_i32 = arith.constant 0 : i32
    %c0_i32_0 = arith.constant 0 : i32
    %c0_i32_1 = arith.constant 0 : i32
    return %c0_i32, %c0_i32_0 : i32, i32
  }
  func.func @transform_4(%arg0: i32) -> i32 {
    %c0_i32 = arith.constant 0 : i32
    %c0_i32_0 = arith.constant 0 : i32
    return %c0_i32 : i32
  }
  func.func @transform_5(%arg0: i32) -> (i32, i32) {
    %c0_i32 = arith.constant 0 : i32
    %c0_i32_0 = arith.constant 0 : i32
    return %arg0, %c0_i32 : i32, i32
  }
}

</mosaic_0001>

<llo_original>
// kernel: tpu_custom_call.1
$region0: #{tpu_custom_call.1}
  #allocation0 [shape = 'u32[]', space=smem, size = 0x4, offset = 0x4, fixed_abs, tag = 'smem constant byte address 0x4 - core index']
  #allocation1 [shape = 'u32[144,128]{1,0:T(1,128)}', space=vmem, size = 0x12000, scoped, tag = 'internal scratch']
  #allocation2 [shape = 'f32[1]{0:T(128)S(6)}', space=smem, size = 0x200, scoped, tag = 'scoped memory for tpu_custom_call.1']
  %s0 = inlined_call_operand.hbm [shape: bf16[16,32], index: 0, kind: input, shape index: {}]
  %s1 = inlined_call_operand.hbm [shape: bf16[32,512], index: 1, kind: input, shape index: {}]
  %s2 = inlined_call_operand.vmem [shape: f32[1,512], index: 2, kind: input, shape index: {}]
  %s3 = inlined_call_operand.hbm [shape: f32[1,512], index: 3, kind: input, shape index: {}]
  %s4 = inlined_call_operand.<no memory space> [shape: f32[1], index: 4, kind: input, shape index: {}]
  %s5 = inlined_call_operand.vmem [shape: f32[16,1], index: 5, kind: output, shape index: {}]
  %s6 = sld [smem:[#allocation0]]
  $region42: #{tpu_custom_call.1} parent=0
    _
  %s8 = ssub.s32 1, %s6
  %s9 = scalar_select 0, %s8, %s6
  %10 = sst [smem:[#allocation2]] %s4
  $region1: #{tpu_custom_call.1} parent=0
    #allocation3 [shape = 'u8[4096]{0}', space=vmem, size = 0x1000, scoped, tag = 'input window, operand 0, single buffered']
    #allocation4 [shape = 's32[1]{0}', space=sflag, size = 0x4, scoped, tag = 'scoped memory for tpu_custom_call.1']
    #allocation5 [shape = 'u8[32768]{0}', space=vmem, size = 0x8000, scoped, tag = 'input window, operand 1, single buffered']
    #allocation6 [shape = 's32[1]{0}', space=sflag, size = 0x4, scoped, tag = 'scoped memory for tpu_custom_call.1']
    #allocation7 [shape = 'u8[2048]{0}', space=vmem, size = 0x800, scoped, tag = 'input window, operand 3, single buffered']
    %11 = vsyncpa [#allocation4], 0
    %12 = vsyncpa [#allocation6], 0
    // Predicated region
    $region2: #{tpu_custom_call.1} parent=1 // pred_check
      _
    $region3: #{tpu_custom_call.1} parent=1 // pred_check_branch
      %14 = sbr.rel (0) target = $region5
    $region4: #{tpu_custom_call.1} parent=1 // pred_region
      %s16 = ssub.s32 128, 128
      %17 = vsyncadd [#allocation4], %s16
      %s18 = sshll.u32 [#allocation3], 4
      %s19 = int_to_ptr.vmem [resolvable:$true] %s18
      %24 = dma.hbm_to_vmem [thread:$0]  %s0, 128, %s19, [#allocation4], 64, 64, 4
    $region5: #{tpu_custom_call.1} parent=1 // pred_fallthru
      _
    // Predicated region
    $region6: #{tpu_custom_call.1} parent=1 // pred_check
      _
    $region7: #{tpu_custom_call.1} parent=1 // pred_check_branch
      %26 = sbr.rel (0) target = $region9
    $region8: #{tpu_custom_call.1} parent=1 // pred_region
      %s28 = ssub.s32 1024, 1024
      %29 = vsyncadd [#allocation6], %s28
      %s30 = sshll.u32 [#allocation5], 4
      %s31 = int_to_ptr.vmem [resolvable:$true] %s30
      %36 = dma.hbm_to_vmem [thread:$0]  %s1, 1024, %s31, [#allocation6], 256, 256, 16
    $region9: #{tpu_custom_call.1} parent=1 // pred_fallthru
      _
    // Predicated region
    $region10: #{tpu_custom_call.1} parent=1 // pred_check
      _
    $region11: #{tpu_custom_call.1} parent=1 // pred_check_branch
      %38 = sbr.rel (0) target = $region13
    $region12: #{tpu_custom_call.1} parent=1 // pred_region
      _
    $region13: #{tpu_custom_call.1} parent=1 // pred_fallthru
      _
    // Predicated region
    $region14: #{tpu_custom_call.1} parent=1 // pred_check
      _
    $region15: #{tpu_custom_call.1} parent=1 // pred_check_branch
      %40 = sbr.rel (0) target = $region17
    $region16: #{tpu_custom_call.1} parent=1 // pred_region
      %s42 = ssub.s32 64, 64
      %43 = vsyncadd [#allocation6], %s42
      %s45 = sshll.u32 [#allocation7], 4
      %s46 = int_to_ptr.vmem [resolvable:$true] %s45
      %48 = dma.hbm_to_vmem [thread:$0]  %s3, 64, %s46, [#allocation6]
    $region17: #{tpu_custom_call.1} parent=1 // pred_fallthru
      _
    // Predicated region
    $region18: #{tpu_custom_call.1} parent=1 // pred_check
      _
    $region19: #{tpu_custom_call.1} parent=1 // pred_check_branch
      %50 = sbr.rel (0) target = $region21
    $region20: #{tpu_custom_call.1} parent=1 // pred_region
      _
    $region21: #{tpu_custom_call.1} parent=1 // pred_fallthru
      _
    // Predicated region
    $region22: #{tpu_custom_call.1} parent=1 // pred_check
      _
    $region23: #{tpu_custom_call.1} parent=1 // pred_check_branch
      %52 = sbr.rel (0) target = $region25
    $region24: #{tpu_custom_call.1} parent=1 // pred_region
      %53 = dma.done [#allocation4], 128
    $region25: #{tpu_custom_call.1} parent=1 // pred_fallthru
      _
    // Predicated region
    $region26: #{tpu_custom_call.1} parent=1 // pred_check
      _
    $region27: #{tpu_custom_call.1} parent=1 // pred_check_branch
      %55 = sbr.rel (0) target = $region29
    $region28: #{tpu_custom_call.1} parent=1 // pred_region
      %56 = dma.done [#allocation6], 1024
    $region29: #{tpu_custom_call.1} parent=1 // pred_fallthru
      _
    // Predicated region
    $region30: #{tpu_custom_call.1} parent=1 // pred_check
      _
    $region31: #{tpu_custom_call.1} parent=1 // pred_check_branch
      %58 = sbr.rel (0) target = $region33
    $region32: #{tpu_custom_call.1} parent=1 // pred_region
      %59 = dma.done [#allocation6], 64
    $region33: #{tpu_custom_call.1} parent=1 // pred_fallthru
      _
    %v61 = vld [vmem:[#allocation3] sm:$0xf]
    %v62 = vld [vmem:[#allocation3 + $0x4] sm:$0xf]
    %v63 = vld [vmem:[#allocation5] sm:$0xff]
    %v64 = vld [vmem:[#allocation5 + $0x8] sm:$0xff]
    %v65 = vld [vmem:[#allocation5 + $0x10] sm:$0xff]
    %v66 = vld [vmem:[#allocation5 + $0x18] sm:$0xff]
    %v67 = vld [vmem:[#allocation5 + $0x20] sm:$0xff]
    %v68 = vld [vmem:[#allocation5 + $0x28] sm:$0xff]
    %v69 = vld [vmem:[#allocation5 + $0x30] sm:$0xff]
    %v70 = vld [vmem:[#allocation5 + $0x38] sm:$0xff]
    %v71 = vld [vmem:[%s2] sm:$0xf]
    %v73 = vlaneseq
    %v74 = vshrl.u32 %v73, 7
    %v75 = vsub.s32 0, %v74
    %v76 = vrot.slane %v71, %v75
    %v77 = vlaneseq
    %v78 = vshrl.u32 %v77, 7
    %v79 = vsub.s32 1, %v78
    %v80 = vrot.slane %v71, %v79
    %v81 = vlaneseq
    %v82 = vshrl.u32 %v81, 7
    %v83 = vsub.s32 2, %v82
    %v84 = vrot.slane %v71, %v83
    %v85 = vlaneseq
    %v86 = vshrl.u32 %v85, 7
    %v87 = vsub.s32 3, %v86
    %v88 = vrot.slane %v71, %v87
    %v95 = vunpack.c.l.b16 %v61
    %v96 = vunpack.c.l.b16 %v62
    %v97 = vpack.c.b16 %v96, %v95
    %v106 = vunpack.c.l.b16 %v63
    %v107 = vunpack.c.h.b16 %v63
    %v108 = vunpack.c.l.b16 %v64
    %v109 = vunpack.c.h.b16 %v64
    %v110 = vunpack.c.l.b16 %v65
    %v111 = vunpack.c.h.b16 %v65
    %v112 = vunpack.c.l.b16 %v66
    %v113 = vunpack.c.h.b16 %v66
    %v114 = vunpack.c.l.b16 %v67
    %v115 = vunpack.c.h.b16 %v67
    %v116 = vunpack.c.l.b16 %v68
    %v117 = vunpack.c.h.b16 %v68
    %v118 = vunpack.c.l.b16 %v69
    %v119 = vunpack.c.h.b16 %v69
    %v120 = vunpack.c.l.b16 %v70
    %v121 = vunpack.c.h.b16 %v70
    %v122 = vpack.c.b16 %v110, %v106
    %v123 = vpack.c.b16 %v111, %v107
    %v124 = vpack.c.b16 %v112, %v108
    %v125 = vpack.c.b16 %v113, %v109
    %v126 = vpack.c.b16 %v118, %v114
    %v127 = vpack.c.b16 %v119, %v115
    %v128 = vpack.c.b16 %v120, %v116
    %v129 = vpack.c.b16 %v121, %v117
    %vm138 = vcmask 261120
    %v140 = vsel %vm138, %v97, 0
    %142 = vmatprep.subr.bf16.mxu0 0
    %143 = vmatpush1.bf16.msra.mxu0 0
    %144 = vmatprep.subr.bf16.mxu0 0
    %145 = vmatpush1.bf16.msra.mxu0 0
    %146 = vmatprep.subr.bf16.mxu0 0
    %147 = vmatpush1.bf16.msra.mxu0 0
    %148 = vmatprep.subr.bf16.mxu0 0
    %149 = vmatpush1.bf16.msra.mxu0 0
    %150 = vmatprep.subr.bf16.mxu0 0
    %151 = vmatpush1.bf16.msra.mxu0 0
    %152 = vmatprep.subr.bf16.mxu0 0
    %153 = vmatpush1.bf16.msra.mxu0 0
    %154 = vmatprep.subr.bf16.mxu0 %v127
    %155 = vmatpush1.bf16.msra.mxu0 %v126
    %156 = vmatprep.subr.bf16.mxu0 %v123
    %157 = vmatpush1.bf16.msra.mxu0 %v122
    %158 = vmatprep.subr.bf16.mxu0 0
    %159 = vmatpush2.bf16.msra.mxu0 0
    %160 = vmatprep.subr.bf16.mxu0 0
    %161 = vmatpush2.bf16.msra.mxu0 0
    %162 = vmatprep.subr.bf16.mxu0 0
    %163 = vmatpush2.bf16.msra.mxu0 0
    %164 = vmatprep.subr.bf16.mxu0 0
    %165 = vmatpush2.bf16.msra.mxu0 0
    %166 = vmatprep.subr.bf16.mxu0 0
    %167 = vmatpush2.bf16.msra.mxu0 0
    %168 = vmatprep.subr.bf16.mxu0 0
    %169 = vmatpush2.bf16.msra.mxu0 0
    %170 = vmatprep.subr.bf16.mxu0 0
    %171 = vmatpush2.bf16.msra.mxu0 0
    %172 = vmatprep.subr.bf16.mxu0 0
    %173 = vmatpush2.bf16.msra.mxu0 0
    %174 = vmatprep.mubr.bf16.mxu0 0
    %175 = vmatmul.mubr.bf16.gmra.mxu0 %v140
    %v176 = vpop.f32.mrf.mxu0
    %v177 = vadd.f32 %v76, %v176
    %v178 = vpop.f32.mrf.mxu0
    %v179 = vadd.f32 %v80, %v178
    %v180 = vpop.f32.mrf.mxu0
    %v181 = vadd.f32 %v76, %v180
    %v182 = vpop.f32.mrf.mxu0
    %v183 = vadd.f32 %v80, %v182
    %184 = vdwg.mxu0
    %185 = vmatprep.subr.bf16.mxu0 0
    %186 = vmatpush1.bf16.msra.mxu0 0
    %187 = vmatprep.subr.bf16.mxu0 0
    %188 = vmatpush1.bf16.msra.mxu0 0
    %189 = vmatprep.subr.bf16.mxu0 0
    %190 = vmatpush1.bf16.msra.mxu0 0
    %191 = vmatprep.subr.bf16.mxu0 0
    %192 = vmatpush1.bf16.msra.mxu0 0
    %193 = vmatprep.subr.bf16.mxu0 0
    %194 = vmatpush1.bf16.msra.mxu0 0
    %195 = vmatprep.subr.bf16.mxu0 0
    %196 = vmatpush1.bf16.msra.mxu0 0
    %197 = vmatprep.subr.bf16.mxu0 %v129
    %198 = vmatpush1.bf16.msra.mxu0 %v128
    %199 = vmatprep.subr.bf16.mxu0 %v125
    %200 = vmatpush1.bf16.msra.mxu0 %v124
    %201 = vmatprep.subr.bf16.mxu0 0
    %202 = vmatpush2.bf16.msra.mxu0 0
    %203 = vmatprep.subr.bf16.mxu0 0
    %204 = vmatpush2.bf16.msra.mxu0 0
    %205 = vmatprep.subr.bf16.mxu0 0
    %206 = vmatpush2.bf16.msra.mxu0 0
    %207 = vmatprep.subr.bf16.mxu0 0
    %208 = vmatpush2.bf16.msra.mxu0 0
    %209 = vmatprep.subr.bf16.mxu0 0
    %210 = vmatpush2.bf16.msra.mxu0 0
    %211 = vmatprep.subr.bf16.mxu0 0
    %212 = vmatpush2.bf16.msra.mxu0 0
    %213 = vmatprep.subr.bf16.mxu0 0
    %214 = vmatpush2.bf16.msra.mxu0 0
    %215 = vmatprep.subr.bf16.mxu0 0
    %216 = vmatpush2.bf16.msra.mxu0 0
    %217 = vmatprep.mubr.bf16.mxu0 0
    %218 = vmatmul.mubr.bf16.gmra.mxu0 %v140
    %v219 = vpop.f32.mrf.mxu0
    %v220 = vadd.f32 %v84, %v219
    %v221 = vpop.f32.mrf.mxu0
    %v222 = vadd.f32 %v88, %v221
    %v223 = vpop.f32.mrf.mxu0
    %v224 = vadd.f32 %v84, %v223
    %v225 = vpop.f32.mrf.mxu0
    %v226 = vadd.f32 %v88, %v225
    %227 = vdwg.mxu0
    %vm228 = vcmp.ge.f32.partialorder %v177, 0.0
    %vm229 = vcmp.ge.f32.partialorder %v179, 0.0
    %vm230 = vcmp.ge.f32.partialorder %v220, 0.0
    %vm231 = vcmp.ge.f32.partialorder %v222, 0.0
    %vm232 = vcmp.ge.f32.partialorder %v181, 0.0
    %vm233 = vcmp.ge.f32.partialorder %v183, 0.0
    %vm234 = vcmp.ge.f32.partialorder %v224, 0.0
    %vm235 = vcmp.ge.f32.partialorder %v226, 0.0
    %v236 = vmul.f32 %v177, 0.01
    %v237 = vmul.f32 %v179, 0.01
    %v238 = vmul.f32 %v220, 0.01
    %v239 = vmul.f32 %v222, 0.01
    %v240 = vmul.f32 %v181, 0.01
    %v241 = vmul.f32 %v183, 0.01
    %v242 = vmul.f32 %v224, 0.01
    %v243 = vmul.f32 %v226, 0.01
    %v244 = vsel %vm228, %v177, %v236
    %v245 = vsel %vm229, %v179, %v237
    %v246 = vsel %vm230, %v220, %v238
    %v247 = vsel %vm231, %v222, %v239
    %v248 = vsel %vm232, %v181, %v240
    %v249 = vsel %vm233, %v183, %v241
    %v250 = vsel %vm234, %v224, %v242
    %v251 = vsel %vm235, %v226, %v243
    %v252 = vld [vmem:[#allocation7] sm:$0xf]
    %v254 = vlaneseq
    %v255 = vshrl.u32 %v254, 7
    %v256 = vsub.s32 0, %v255
    %v257 = vrot.slane %v252, %v256
    %v258 = vlaneseq
    %v259 = vshrl.u32 %v258, 7
    %v260 = vsub.s32 1, %v259
    %v261 = vrot.slane %v252, %v260
    %v262 = vlaneseq
    %v263 = vshrl.u32 %v262, 7
    %v264 = vsub.s32 2, %v263
    %v265 = vrot.slane %v252, %v264
    %v266 = vlaneseq
    %v267 = vshrl.u32 %v266, 7
    %v268 = vsub.s32 3, %v267
    %v269 = vrot.slane %v252, %v268
    %v274 = vmul.f32 %v244, %v257
    %v275 = vmul.f32 %v245, %v261
    %v276 = vmul.f32 %v246, %v265
    %v277 = vmul.f32 %v247, %v269
    %v278 = vmul.f32 %v248, %v257
    %v279 = vmul.f32 %v249, %v261
    %v280 = vmul.f32 %v250, %v265
    %v281 = vmul.f32 %v251, %v269
    %v282 = vadd.f32 %v274, %v275
    %v283 = vadd.f32 %v282, %v276
    %v284 = vadd.f32 %v283, %v277
    %285 = vadd.xlane.f32.xlu0 %v284
    %v286 = vpop.xlane.xlu0 %285
    %v287 = vadd.f32 %v278, %v279
    %v288 = vadd.f32 %v287, %v280
    %v289 = vadd.f32 %v288, %v281
    %290 = vadd.xlane.f32.xlu0 %v289
    %v291 = vpop.xlane.xlu0 %290
    %s292 = sld [smem:[#allocation2]]
    %v293 = vstv %s292
    %v294 = vadd.f32 %v286, %v293
    %v295 = vadd.f32 %v291, %v293
    %v296 = vxor.u32 %v294, 2147483648
    %v297 = vxor.u32 %v295, 2147483648
    %v298 = vmul.f32 %v296, 1.442695
    %v299 = vpow.pop %v298
    %v300 = vmul.f32 %v297, 1.442695
    %v301 = vpow.pop %v300
    %v302 = vadd.f32 %v299, 1.0
    %v303 = vadd.f32 %v301, 1.0
    %v304 = vrcp.pop %v302
    %v305 = vmul.f32 1.0, %v304
    %v306 = vrcp.pop %v303
    %v307 = vmul.f32 1.0, %v306
    %vm308 = vcmask 7168
    %309 = vst.msk [vmem:[%s5] sm:$0xff] %vm308, %v305
    %310 = vst.msk [vmem:[%s5 + $0x8] sm:$0xff] %vm308, %v307
    // Predicated region
    $region34: #{tpu_custom_call.1} parent=1 // pred_check
      _
    $region35: #{tpu_custom_call.1} parent=1 // pred_check_branch
      %312 = sbr.rel (0) target = $region37
    $region36: #{tpu_custom_call.1} parent=1 // pred_region
      _
    $region37: #{tpu_custom_call.1} parent=1 // pred_fallthru
      _
    // Predicated region
    $region38: #{tpu_custom_call.1} parent=1 // pred_check
      _
    $region39: #{tpu_custom_call.1} parent=1 // pred_check_branch
      %314 = sbr.rel (0) target = $region41
    $region40: #{tpu_custom_call.1} parent=1 // pred_region
      _
    $region41: #{tpu_custom_call.1} parent=1 // pred_fallthru
      _
    %315 = vsyncpa [#allocation4], 1
    %316 = vsyncpa [#allocation6], 1

</llo_original>
